<compile_context>
chip_gen: v6e
topology: v6e:2x2x1
jax: 0.10.0
libtpu: 0.0.40
codegen_flags: <defaults>
</compile_context>

<pallas_src>
import jax
import jax.numpy as jnp
from jax.experimental import pallas as pl
from jax.experimental.pallas import tpu as pltpu


def _scale_mul_kernel(s_ref, x_ref, o_ref):
    # s_ref: (tile_rows, 1) per-row scale block for this grid step.
    # x_ref: (tile_rows, HW) activation block.
    o_ref[...] = (x_ref[...] * s_ref[...]).astype(o_ref.dtype)


def _pick_tile_rows(rows, row_bytes, itemsize, vmem_block_bytes):
    """Largest row-tile that (a) divides `rows`, (b) is sublane-aligned for
    this dtype, and (c) keeps one block under the VMEM byte budget.  Falls
    back to a single full-extent block when no aligned split exists or the
    whole slab already fits the budget."""
    if rows * row_bytes <= vmem_block_bytes:
        return rows
    # dtype-aware min sublane rows: 8 (f32), 16 (bf16/f16), 32 (int8/fp8)
    min_rows = max(1, 32 // itemsize)
    best = None
    t = min_rows
    while t < rows:
        if rows % t == 0 and t * row_bytes <= vmem_block_bytes:
            best = t
        t += min_rows
    return rows if best is None else best


def channel_scale_mul(scale_nchw, x_nchw, *,
                      vmem_block_bytes=4 * 1024 * 1024,
                      core_parallel=False):
    """Computes scale_nchw * x_nchw with broadcasting, like operator.mul.

    scale_nchw: (N, C, 1, 1)
    x_nchw:     (N, C, H, W)
    returns:    (N, C, H, W) in x_nchw.dtype
    """
    n, c, h, w = x_nchw.shape
    assert scale_nchw.shape == (n, c, 1, 1)

    rows = n * c
    hw = h * w
    dtype = x_nchw.dtype
    itemsize = jnp.dtype(dtype).itemsize

    x2d = x_nchw.reshape(rows, hw)                      # (N*C, HW), spatial on lanes
    s2d = scale_nchw.reshape(rows, 1).astype(dtype)     # (N*C, 1), match act dtype

    row_bytes = hw * itemsize
    tile_rows = _pick_tile_rows(rows, row_bytes, itemsize, vmem_block_bytes)
    num_tiles = rows // tile_rows

    if num_tiles > 1 and core_parallel:
        # TODO(synk): verify in an xprof trace that both v7x TensorCores are
        # active before relying on this path.
        dim_sems = (pltpu.CORE_PARALLEL,)
    else:
        dim_sems = ("parallel",)

    cost = pl.CostEstimate(
        flops=rows * hw,
        transcendentals=0,
        bytes_accessed=2 * rows * hw * itemsize + rows * itemsize,
    )

    out2d = pl.pallas_call(
        _scale_mul_kernel,
        out_shape=jax.ShapeDtypeStruct((rows, hw), dtype),
        grid_spec=pltpu.PrefetchScalarGridSpec(
            num_scalar_prefetch=0,
            grid=(num_tiles,),
            in_specs=[
                # Scale: one static window per row-block (per-step DMA is noise).
                pl.BlockSpec((tile_rows, 1), lambda i: (i, 0)),
                # Activations: tiled along rows only, full spatial extent on lanes.
                pl.BlockSpec((tile_rows, hw), lambda i: (i, 0)),
            ],
            out_specs=pl.BlockSpec((tile_rows, hw), lambda i: (i, 0)),
        ),
        compiler_params=pltpu.CompilerParams(dimension_semantics=dim_sems),
        cost_estimate=cost,
    )(s2d, x2d)

    return out2d.reshape(n, c, h, w)


if __name__ == "__main__":
    key = jax.random.PRNGKey(0)
    k1, k2 = jax.random.split(key)

    # Small shapes consistent with the module (NCHW, per-channel scale, 14x14).
    x487 = jax.random.normal(k1, (1, 16, 14, 14), dtype=jnp.float32)
    x492 = jax.random.normal(k2, (1, 16, 1, 1), dtype=jnp.float32)
    ref = x492 * x487

    # Default path: single full-array block (one grid step, no per-step overhead).
    out = jax.block_until_ready(channel_scale_mul(x492, x487))
    assert out.shape == ref.shape == (1, 16, 14, 14)
    assert jnp.allclose(out, ref, atol=1e-6, rtol=1e-6)

    # Multi-tile path: force a 2-block split via a tiny VMEM budget.
    out2 = jax.block_until_ready(
        channel_scale_mul(x492, x487, vmem_block_bytes=8 * 14 * 14 * 4))
    assert jnp.allclose(out2, ref, atol=1e-6, rtol=1e-6)

    # bf16 path: halves HBM bytes on this purely bandwidth-bound op.
    xb = x487.astype(jnp.bfloat16)
    sb = x492.astype(jnp.bfloat16)
    outb = jax.block_until_ready(channel_scale_mul(sb, xb))
    refb = (sb * xb).astype(jnp.float32)
    assert outb.dtype == jnp.bfloat16
    assert jnp.allclose(outb.astype(jnp.float32), refb, atol=1e-2, rtol=1e-2)

    print("KERNEL_OK")
</pallas_src>

<mosaic_0001>
module attributes {stable_mosaic.version = 11 : i64} {
  func.func @_scale_mul_kernel(%arg0: i32, %arg1: memref<16x1xf32, #tpu.memory_space<vmem>>, %arg2: memref<16x196xf32, #tpu.memory_space<vmem>>, %arg3: memref<16x196xf32, #tpu.memory_space<vmem>>) attributes {dimension_semantics = [#tpu.dimension_semantics<parallel>], iteration_bounds = array<i64: 1>, scalar_prefetch = 0 : i64, scratch_operands = 0 : i64, tpu.core_type = #tpu.core_type<tc>, window_params = [{transform_indices = @transform_0, window_bounds = array<i64: 16, 1>}, {transform_indices = @transform_1, window_bounds = array<i64: 16, 196>}, {transform_indices = @transform_2, window_bounds = array<i64: 16, 196>}]} {
    %c0 = arith.constant 0 : index
    %c0_0 = arith.constant 0 : index
    %0 = vector.load %arg2[%c0, %c0_0] : memref<16x196xf32, #tpu.memory_space<vmem>>, vector<16x196xf32>
    %c0_1 = arith.constant 0 : index
    %c0_2 = arith.constant 0 : index
    %1 = vector.load %arg1[%c0_1, %c0_2] : memref<16x1xf32, #tpu.memory_space<vmem>>, vector<16x1xf32>
    %2 = vector.broadcast %1 : vector<16x1xf32> to vector<16x196xf32>
    %3 = arith.mulf %0, %2 : vector<16x196xf32>
    %c0_3 = arith.constant 0 : index
    %c0_4 = arith.constant 0 : index
    %4 = vector.load %arg3[%c0_3, %c0_4] : memref<16x196xf32, #tpu.memory_space<vmem>>, vector<16x196xf32>
    tpu.vector_store %arg3[%c0_3, %c0_4], %3 {strides = array<i32>} : memref<16x196xf32, #tpu.memory_space<vmem>>, vector<16x196xf32>,
    return
  }
  func.func @transform_0(%arg0: i32) -> (i32, i32) {
    %c0_i32 = arith.constant 0 : i32
    %c0_i32_0 = arith.constant 0 : i32
    return %arg0, %c0_i32 : i32, i32
  }
  func.func @transform_1(%arg0: i32) -> (i32, i32) {
    %c0_i32 = arith.constant 0 : i32
    %c0_i32_0 = arith.constant 0 : i32
    return %arg0, %c0_i32 : i32, i32
  }
  func.func @transform_2(%arg0: i32) -> (i32, i32) {
    %c0_i32 = arith.constant 0 : i32
    %c0_i32_0 = arith.constant 0 : i32
    return %arg0, %c0_i32 : i32, i32
  }
}

</mosaic_0001>

<llo_original>
// kernel: tpu_custom_call.1
$region0: #{tpu_custom_call.1}
  #allocation0 [shape = 'u32[]', space=smem, size = 0x4, offset = 0x4, fixed_abs, tag = 'smem constant byte address 0x4 - core index']
  #allocation1 [shape = 'u32[144,128]{1,0:T(1,128)}', space=vmem, size = 0x12000, scoped, tag = 'internal scratch']
  %s0 = inlined_call_operand.vmem [shape: f32[16,1], index: 0, kind: input, shape index: {}]
  %s1 = inlined_call_operand.hbm [shape: f32[16,196], index: 1, kind: input, shape index: {}]
  %s2 = inlined_call_operand.hbm [shape: f32[16,196], index: 2, kind: output, shape index: {}]
  %s3 = sld [smem:[#allocation0]]
  $region22: #{tpu_custom_call.1} parent=0
    _
  %s5 = ssub.s32 1, %s3
  %s6 = scalar_select 0, %s5, %s3
  $region1: #{tpu_custom_call.1} parent=0
    #allocation2 [shape = 'u8[16384]{0}', space=vmem, size = 0x4000, scoped, tag = 'input window, operand 1, single buffered']
    #allocation3 [shape = 's32[1]{0}', space=sflag, size = 0x4, scoped, tag = 'scoped memory for tpu_custom_call.1']
    #allocation4 [shape = 's32[1]{0}', space=sflag, size = 0x4, scoped, tag = 'scoped memory for tpu_custom_call.1']
    #allocation5 [shape = 'u8[16384]{0}', space=vmem, size = 0x4000, scoped, tag = 'output window, operand 0, single buffered']
    %7 = vsyncpa [#allocation3], 0
    %8 = vsyncpa [#allocation4], 0
    // Predicated region
    $region2: #{tpu_custom_call.1} parent=1 // pred_check
      _
    $region3: #{tpu_custom_call.1} parent=1 // pred_check_branch
      %10 = sbr.rel (0) target = $region5
    $region4: #{tpu_custom_call.1} parent=1 // pred_region
      _
    $region5: #{tpu_custom_call.1} parent=1 // pred_fallthru
      _
    // Predicated region
    $region6: #{tpu_custom_call.1} parent=1 // pred_check
      _
    $region7: #{tpu_custom_call.1} parent=1 // pred_check_branch
      %12 = sbr.rel (0) target = $region9
    $region8: #{tpu_custom_call.1} parent=1 // pred_region
      %s14 = ssub.s32 512, 512
      %15 = vsyncadd [#allocation3], %s14
      %s16 = sshll.u32 [#allocation2], 4
      %s17 = int_to_ptr.vmem [resolvable:$true] %s16
      %22 = dma.hbm_to_vmem [thread:$0]  %s1, 512, %s17, [#allocation3], 256, 256, 16
    $region9: #{tpu_custom_call.1} parent=1 // pred_fallthru
      _
    // Predicated region
    $region10: #{tpu_custom_call.1} parent=1 // pred_check
      _
    $region11: #{tpu_custom_call.1} parent=1 // pred_check_branch
      %24 = sbr.rel (0) target = $region13
    $region12: #{tpu_custom_call.1} parent=1 // pred_region
      %25 = dma.done [#allocation3], 512
    $region13: #{tpu_custom_call.1} parent=1 // pred_fallthru
      _
    %v26 = vld [vmem:[#allocation2] sm:$0xff]
    %v27 = vld [vmem:[#allocation2 + $0x8] sm:$0xff]
    %v28 = vld [vmem:[#allocation2 + $0x10] sm:$0xff]
    %v29 = vld [vmem:[#allocation2 + $0x18] sm:$0xff]
    %v30 = vld [vmem:[%s0] sm:$0xff]
    %v31 = vld [vmem:[%s0 + $0x8] sm:$0xff]
    %33 = vset.pattern.permute.xlu0 0
    %34 = vperm.xlu0 %33, %v30
    %v35 = vpop.permute.xlu0 %34
    %38 = vset.pattern.permute.xlu0 0
    %39 = vperm.xlu0 %38, %v31
    %v40 = vpop.permute.xlu0 %39
    %v42 = vmul.f32 %v26, %v35
    %v43 = vmul.f32 %v27, %v35
    %v44 = vmul.f32 %v28, %v40
    %v45 = vmul.f32 %v29, %v40
    %46 = vst [vmem:[#allocation5] sm:$0xff] %v42
    %vm47 = vcmask 556032
    %48 = vst.msk [vmem:[#allocation5 + $0x8] sm:$0xff] %vm47, %v43
    %49 = vst [vmem:[#allocation5 + $0x10] sm:$0xff] %v44
    %50 = vst.msk [vmem:[#allocation5 + $0x18] sm:$0xff] %vm47, %v45
    // Predicated region
    $region14: #{tpu_custom_call.1} parent=1 // pred_check
      _
    $region15: #{tpu_custom_call.1} parent=1 // pred_check_branch
      %52 = sbr.rel (0) target = $region17
    $region16: #{tpu_custom_call.1} parent=1 // pred_region
      %s54 = ssub.s32 512, 512
      %55 = vsyncadd [#allocation4], %s54
      %s56 = sshll.u32 [#allocation5], 4
      %s57 = int_to_ptr.vmem [resolvable:$true] %s56
      %62 = dma.vmem_to_hbm [thread:$0]  %s57, 512, %s2, [#allocation4], 256, 256, 16
    $region17: #{tpu_custom_call.1} parent=1 // pred_fallthru
      _
    // Predicated region
    $region18: #{tpu_custom_call.1} parent=1 // pred_check
      _
    $region19: #{tpu_custom_call.1} parent=1 // pred_check_branch
      %64 = sbr.rel (0) target = $region21
    $region20: #{tpu_custom_call.1} parent=1 // pred_region
      %65 = dma.done [#allocation4], 512
    $region21: #{tpu_custom_call.1} parent=1 // pred_fallthru
      _
    %66 = vsyncpa [#allocation3], 1
    %67 = vsyncpa [#allocation4], 1

</llo_original>
